<compile_context>
chip_gen: v7x
topology: tpu7x:2x2x1
jax: 0.10.0
libtpu: 0.0.40
codegen_flags: <defaults>
</compile_context>

<pallas_src>
import math
from functools import partial

import jax
import jax.numpy as jnp
from jax import lax
from jax.experimental import pallas as pl
from jax.experimental.pallas import tpu as pltpu


# ----------------------------------------------------------------------------
# Row-tiled linear projection:  y = x @ W^T + b   (W in PyTorch (out, in) layout)
# ----------------------------------------------------------------------------
def _linear_kernel(x_ref, w_ref, b_ref, o_ref):
    x = x_ref[...]                            # (tm, D_in)
    w = w_ref[...]                            # (D_out, D_in)
    # Contract the minor dims directly on the MXU -- no w.T materialization.
    y = lax.dot_general(x, w, (((1,), (1,)), ((), ())),
                        preferred_element_type=jnp.float32)
    o_ref[...] = (y + b_ref[...]).astype(o_ref.dtype)


def _pick_row_tile(n):
    for cand in (512, 256, 128, 64, 32, 16, 8):
        if n % cand == 0:
            return cand
    return n                                  # tiny / odd row counts: one block


def linear(x, w, b):
    """x: (N, D_in), w: (D_out, D_in), b: (D_out,) -> (N, D_out)."""
    n, d_in = x.shape
    d_out = w.shape[0]
    tm = _pick_row_tile(n)
    grid = (n // tm,)
    cost = pl.CostEstimate(
        flops=2 * n * d_in * d_out,
        transcendentals=0,
        bytes_accessed=4 * (n * d_in + d_out * d_in + d_out + n * d_out),
    )
    return pl.pallas_call(
        _linear_kernel,
        out_shape=jax.ShapeDtypeStruct((n, d_out), x.dtype),
        grid_spec=pltpu.PrefetchScalarGridSpec(
            num_scalar_prefetch=0,
            grid=grid,
            in_specs=[
                pl.BlockSpec((tm, d_in), lambda i: (i, 0)),      # streamed rows
                pl.BlockSpec((d_out, d_in), lambda i: (0, 0)),   # weight resident
                pl.BlockSpec((1, d_out), lambda i: (0, 0)),      # bias resident
            ],
            out_specs=pl.BlockSpec((tm, d_out), lambda i: (i, 0)),
        ),
        compiler_params=pltpu.CompilerParams(
            dimension_semantics=("parallel",),
        ),
        cost_estimate=cost,
    )(x, w, b.reshape(1, d_out))


# ----------------------------------------------------------------------------
# Scaled dot-product attention: one batch (all heads) per grid step.
# Inputs/outputs keep the natural (B, S, d_model) layout -- heads are sliced
# along the feature (lane) axis in-kernel, so no split/merge transposes exist.
# ----------------------------------------------------------------------------
def _mha_attn_kernel(valid_ref, q_ref, k_ref, v_ref, o_ref, *,
                     num_heads, head_dim):
    b = pl.program_id(0)
    q = q_ref[0].astype(jnp.float32)          # (Sq, D)
    k = k_ref[0].astype(jnp.float32)          # (Sk, D)
    v = v_ref[0].astype(jnp.float32)          # (Sk, D)
    sq = q.shape[0]
    sk = k.shape[0]

    # Length mask (shared by every head of this batch): key pos >= valid_len
    valid = valid_ref[b]                      # scalar int32 from SMEM
    kpos = lax.broadcasted_iota(jnp.int32, (sq, sk), 1)
    masked = kpos >= valid

    scale = jnp.float32(1.0 / math.sqrt(head_dim))   # folded into Q, compile-time
    head_outs = []
    for h in range(num_heads):                # small static unroll over heads
        lo = h * head_dim
        qh = q[:, lo:lo + head_dim] * scale
        kh = k[:, lo:lo + head_dim]
        vh = v[:, lo:lo + head_dim]
        # Scores: contract minor dims directly (no kh.T materialization).
        s = lax.dot_general(qh, kh, (((1,), (1,)), ((), ())),
                            preferred_element_type=jnp.float32)
        s = jnp.where(masked, jnp.float32(-1000000.0), s)
        m = jnp.max(s, axis=-1, keepdims=True)
        p = jnp.exp(s - m)
        p = p * pl.reciprocal(jnp.sum(p, axis=-1, keepdims=True), approx=True)
        head_outs.append(jnp.dot(p, vh, preferred_element_type=jnp.float32))

    # Lane-dense store: one (Sq, d_model) slab; heads land in the same column
    # order as the reference reshape(B, S, H, Dh) head split.
    o_ref[0] = jnp.concatenate(head_outs, axis=-1).astype(o_ref.dtype)


def dot_product_attention(q, k, v, valid_lens, num_heads):
    """q: (B, Sq, D), k/v: (B, Sk, D) projected tensors; valid_lens: int32 (B,)."""
    b, sq, d_model = q.shape
    sk = k.shape[1]
    head_dim = d_model // num_heads
    cost = pl.CostEstimate(
        flops=4 * b * num_heads * sq * sk * head_dim,   # QK^T and PV matmuls
        transcendentals=b * num_heads * sq * sk,        # exp
        bytes_accessed=4 * b * (2 * sq * d_model + 2 * sk * d_model),
    )
    grid_spec = pltpu.PrefetchScalarGridSpec(
        num_scalar_prefetch=1,
        grid=(b,),
        in_specs=[
            pl.BlockSpec((1, sq, d_model), lambda i, vl: (i, 0, 0)),
            pl.BlockSpec((1, sk, d_model), lambda i, vl: (i, 0, 0)),
            pl.BlockSpec((1, sk, d_model), lambda i, vl: (i, 0, 0)),
        ],
        out_specs=pl.BlockSpec((1, sq, d_model), lambda i, vl: (i, 0, 0)),
    )
    return pl.pallas_call(
        partial(_mha_attn_kernel, num_heads=num_heads, head_dim=head_dim),
        out_shape=jax.ShapeDtypeStruct((b, sq, d_model), q.dtype),
        grid_spec=grid_spec,
        compiler_params=pltpu.CompilerParams(
            dimension_semantics=("parallel",),   # batches independent -> dual TC on v7x
        ),
        cost_estimate=cost,
    )(valid_lens, q, k, v)


# ----------------------------------------------------------------------------
# MultiHeadAttention forward (glue in plain JAX, hot paths in Pallas)
# ----------------------------------------------------------------------------
def multi_head_attention(params, queries, keys, values, valid_lens, num_heads):
    b, sq, d_model = queries.shape
    sk = keys.shape[1]

    # Projections (row-tiled Pallas linear kernels).  Note: for pure self-
    # attention (queries is keys is values) these could share one x tile in a
    # single fused call; kept separate since the module accepts distinct inputs.
    q = linear(queries.reshape(b * sq, d_model), params["w_q"], params["b_q"]).reshape(b, sq, d_model)
    k = linear(keys.reshape(b * sk, d_model), params["w_k"], params["b_k"]).reshape(b, sk, d_model)
    v = linear(values.reshape(b * sk, d_model), params["w_v"], params["b_v"]).reshape(b, sk, d_model)

    # valid_lens=None means no masking -> equivalent to valid_len = k_seq_len
    if valid_lens is None:
        vl = jnp.full((b,), sk, dtype=jnp.int32)
    else:
        vl = valid_lens.astype(jnp.int32)
        # TODO(synk): 2-D valid_lens ([B, k_seq]) variant of encode_mask not wired up.

    # No head split/merge transposes: the kernel slices heads along the lane
    # dim and writes (B, Sq, d_model) directly.
    attn = dot_product_attention(q, k, v, vl, num_heads)   # (B, Sq, D)

    out = linear(attn.reshape(b * sq, d_model), params["w_o"], params["b_o"])
    return out.reshape(b, sq, d_model)


# ----------------------------------------------------------------------------
# Deterministic parameter init (PyTorch nn.Linear default: U(-1/sqrt(fan_in), +))
# ----------------------------------------------------------------------------
def init_params(key, d_model):
    bound = 1.0 / math.sqrt(d_model)
    names = ["q", "k", "v", "o"]
    params = {}
    keys = jax.random.split(key, 2 * len(names))
    for i, n in enumerate(names):
        params[f"w_{n}"] = jax.random.uniform(
            keys[2 * i], (d_model, d_model), jnp.float32, -bound, bound
        )
        params[f"b_{n}"] = jax.random.uniform(
            keys[2 * i + 1], (d_model,), jnp.float32, -bound, bound
        )
    return params


# ----------------------------------------------------------------------------
# Pure-JAX reference (mirrors the PyTorch module) for a correctness check
# ----------------------------------------------------------------------------
def reference_mha(params, queries, keys, values, valid_lens, num_heads):
    b, sq, d_model = queries.shape
    sk = keys.shape[1]
    dh = d_model // num_heads

    def lin(x, w, bb):
        return x @ w.T + bb

    q = lin(queries, params["w_q"], params["b_q"])
    k = lin(keys, params["w_k"], params["b_k"])
    v = lin(values, params["w_v"], params["b_v"])
    q = q.reshape(b, sq, num_heads, dh).transpose(0, 2, 1, 3).reshape(b * num_heads, sq, dh)
    k = k.reshape(b, sk, num_heads, dh).transpose(0, 2, 1, 3).reshape(b * num_heads, sk, dh)
    v = v.reshape(b, sk, num_heads, dh).transpose(0, 2, 1, 3).reshape(b * num_heads, sk, dh)

    score = jnp.einsum("bqd,bkd->bqk", q, k) / math.sqrt(dh)
    if valid_lens is not None:
        vl = jnp.repeat(valid_lens, num_heads)  # (B*H,)
        kpos = jnp.arange(sk)[None, None, :]
        mask = kpos >= vl[:, None, None]
        score = jnp.where(mask, -1000000.0, score)
    p = jax.nn.softmax(score, axis=-1)
    attn = jnp.einsum("bqk,bkd->bqd", p, v)
    attn = attn.reshape(b, num_heads, sq, dh).transpose(0, 2, 1, 3).reshape(b, sq, d_model)
    return lin(attn, params["w_o"], params["b_o"])


if __name__ == "__main__":
    d_model = 32
    num_heads = 4
    batch = 2
    q_seq = 8
    k_seq = 8

    key = jax.random.PRNGKey(0)
    kq, kk, kv, kp = jax.random.split(key, 4)
    queries = jax.random.normal(kq, (batch, q_seq, d_model), jnp.float32)
    keys_ = jax.random.normal(kk, (batch, k_seq, d_model), jnp.float32)
    values = jax.random.normal(kv, (batch, k_seq, d_model), jnp.float32)
    valid_lens = jnp.array([3, 6], dtype=jnp.int32)

    params = init_params(kp, d_model)

    # Masked case
    out = multi_head_attention(params, queries, keys_, values, valid_lens, num_heads)
    out = jax.block_until_ready(out)
    ref = reference_mha(params, queries, keys_, values, valid_lens, num_heads)
    assert out.shape == (batch, q_seq, d_model)
    # Slightly looser tolerance: approx reciprocal (EUP) in the softmax denom.
    assert jnp.allclose(out, ref, atol=2e-3, rtol=2e-3), "mismatch vs reference (masked)"

    # No-mask case (valid_lens=None path)
    out_nm = multi_head_attention(params, queries, keys_, values, None, num_heads)
    out_nm = jax.block_until_ready(out_nm)
    ref_nm = reference_mha(params, queries, keys_, values, None, num_heads)
    assert jnp.allclose(out_nm, ref_nm, atol=2e-3, rtol=2e-3), "mismatch vs reference (no mask)"

    print("KERNEL_OK")
</pallas_src>

<mosaic_0001>
module attributes {stable_mosaic.version = 11 : i64} {
  func.func @_linear_kernel(%arg0: i32, %arg1: memref<16x32xf32, #tpu.memory_space<vmem>>, %arg2: memref<32x32xf32, #tpu.memory_space<vmem>>, %arg3: memref<1x32xf32, #tpu.memory_space<vmem>>, %arg4: memref<16x32xf32, #tpu.memory_space<vmem>>) attributes {dimension_semantics = [#tpu.dimension_semantics<parallel>], iteration_bounds = array<i64: 1>, scalar_prefetch = 0 : i64, scratch_operands = 0 : i64, tpu.core_type = #tpu.core_type<tc>, window_params = [{transform_indices = @transform_0, window_bounds = array<i64: 16, 32>}, {pipeline_mode = #tpu.pipeline_mode<synchronous>, transform_indices = @transform_1, window_bounds = array<i64: 32, 32>}, {pipeline_mode = #tpu.pipeline_mode<synchronous>, transform_indices = @transform_2, window_bounds = array<i64: 1, 32>}, {transform_indices = @transform_3, window_bounds = array<i64: 16, 32>}]} {
    %c0 = arith.constant 0 : index
    %c0_0 = arith.constant 0 : index
    %0 = vector.load %arg1[%c0, %c0_0] : memref<16x32xf32, #tpu.memory_space<vmem>>, vector<16x32xf32>
    %c0_1 = arith.constant 0 : index
    %c0_2 = arith.constant 0 : index
    %1 = vector.load %arg2[%c0_1, %c0_2] : memref<32x32xf32, #tpu.memory_space<vmem>>, vector<32x32xf32>
    %cst = arith.constant dense<0.000000e+00> : vector<16x32xf32>
    %2 = tpu.matmul %0, %1, %cst {dimension_numbers = #tpu.dot_dimension_numbers<[1], [1], [0], [0], [0, 0, 1, 0], [], []>} : vector<16x32xf32>, vector<32x32xf32>, vector<16x32xf32> -> vector<16x32xf32>
    %c0_3 = arith.constant 0 : index
    %c0_4 = arith.constant 0 : index
    %3 = vector.load %arg3[%c0_3, %c0_4] : memref<1x32xf32, #tpu.memory_space<vmem>>, vector<1x32xf32>
    %4 = vector.broadcast %3 : vector<1x32xf32> to vector<16x32xf32>
    %5 = arith.addf %2, %4 : vector<16x32xf32>
    %c0_5 = arith.constant 0 : index
    %c0_6 = arith.constant 0 : index
    %6 = vector.load %arg4[%c0_5, %c0_6] : memref<16x32xf32, #tpu.memory_space<vmem>>, vector<16x32xf32>
    tpu.vector_store %arg4[%c0_5, %c0_6], %5 {strides = array<i32>} : memref<16x32xf32, #tpu.memory_space<vmem>>, vector<16x32xf32>,
    return
  }
  func.func @transform_0(%arg0: i32) -> (i32, i32) {
    %c0_i32 = arith.constant 0 : i32
    %c0_i32_0 = arith.constant 0 : i32
    return %arg0, %c0_i32 : i32, i32
  }
  func.func @transform_1(%arg0: i32) -> (i32, i32) {
    %c0_i32 = arith.constant 0 : i32
    %c0_i32_0 = arith.constant 0 : i32
    %c0_i32_1 = arith.constant 0 : i32
    return %c0_i32, %c0_i32_0 : i32, i32
  }
  func.func @transform_2(%arg0: i32) -> (i32, i32) {
    %c0_i32 = arith.constant 0 : i32
    %c0_i32_0 = arith.constant 0 : i32
    %c0_i32_1 = arith.constant 0 : i32
    return %c0_i32, %c0_i32_0 : i32, i32
  }
  func.func @transform_3(%arg0: i32) -> (i32, i32) {
    %c0_i32 = arith.constant 0 : i32
    %c0_i32_0 = arith.constant 0 : i32
    return %arg0, %c0_i32 : i32, i32
  }
}

</mosaic_0001>

<llo_original>
// kernel: tpu_custom_call.1
$region0: #{tpu_custom_call.1}
  #allocation0 [shape = 'u32[]', space=smem, size = 0x4, offset = 0x4, fixed_abs, tag = 'smem constant byte address 0x4 - core index']
  #allocation1 [shape = 'u32[144,128]{1,0:T(1,128)}', space=vmem, size = 0x12000, scoped, tag = 'internal scratch']
  %s0 = inlined_call_operand.hbm [shape: f32[16,32], index: 0, kind: input, shape index: {}]
  %s1 = inlined_call_operand.hbm [shape: f32[32,32], index: 1, kind: input, shape index: {}]
  %s2 = inlined_call_operand.vmem [shape: f32[1,32], index: 2, kind: input, shape index: {}]
  %s3 = inlined_call_operand.hbm [shape: f32[16,32], index: 3, kind: output, shape index: {}]
  %s4 = sld [smem:[#allocation0]]
  $region30: #{tpu_custom_call.1} parent=0
    _
  %s6 = ssub.s32 1, %s4
  %s7 = scalar_select 0, %s6, %s4
  $region1: #{tpu_custom_call.1} parent=0
    #allocation2 [shape = 'u8[8192]{0}', space=vmem, size = 0x2000, scoped, tag = 'input window, operand 0, single buffered']
    #allocation3 [shape = 's32[1]{0}', space=sflag, size = 0x4, scoped, tag = 'scoped memory for tpu_custom_call.1']
    #allocation4 [shape = 's32[1]{0}', space=sflag, size = 0x4, scoped, tag = 'scoped memory for tpu_custom_call.1']
    #allocation5 [shape = 'u8[16384]{0}', space=vmem, size = 0x4000, scoped, tag = 'input window, operand 1, single buffered']
    #allocation6 [shape = 's32[1]{0}', space=sflag, size = 0x4, scoped, tag = 'scoped memory for tpu_custom_call.1']
    #allocation7 [shape = 'u8[8192]{0}', space=vmem, size = 0x2000, scoped, tag = 'output window, operand 0, single buffered']
    %8 = vsyncpa [#allocation3], 0
    %9 = vsyncpa [#allocation6], 0
    %10 = vsyncpa [#allocation4], 0
    // Predicated region
    $region2: #{tpu_custom_call.1} parent=1 // pred_check
      _
    $region3: #{tpu_custom_call.1} parent=1 // pred_check_branch
      %12 = sbr.rel (0) target = $region5
    $region4: #{tpu_custom_call.1} parent=1 // pred_region
      %s14 = ssub.s32 256, 256
      %15 = vsyncadd [#allocation3], %s14
      %s16 = sshll.u32 [#allocation2], 4
      %s17 = int_to_ptr.vmem [resolvable:$true] %s16
      %22 = dma.hbm_to_vmem [thread:$0]  %s0, 256, %s17, [#allocation3], 128, 128, 8
    $region5: #{tpu_custom_call.1} parent=1 // pred_fallthru
      _
    // Predicated region
    $region6: #{tpu_custom_call.1} parent=1 // pred_check
      _
    $region7: #{tpu_custom_call.1} parent=1 // pred_check_branch
      %24 = sbr.rel (0) target = $region9
    $region8: #{tpu_custom_call.1} parent=1 // pred_region
      %s26 = ssub.s32 512, 512
      %27 = vsyncadd [#allocation6], %s26
      %s28 = sshll.u32 [#allocation5], 4
      %s29 = int_to_ptr.vmem [resolvable:$true] %s28
      %34 = dma.hbm_to_vmem [thread:$0]  %s1, 512, %s29, [#allocation6], 128, 128, 8
    $region9: #{tpu_custom_call.1} parent=1 // pred_fallthru
      _
    // Predicated region
    $region10: #{tpu_custom_call.1} parent=1 // pred_check
      _
    $region11: #{tpu_custom_call.1} parent=1 // pred_check_branch
      %36 = sbr.rel (0) target = $region13
    $region12: #{tpu_custom_call.1} parent=1 // pred_region
      _
    $region13: #{tpu_custom_call.1} parent=1 // pred_fallthru
      _
    // Predicated region
    $region14: #{tpu_custom_call.1} parent=1 // pred_check
      _
    $region15: #{tpu_custom_call.1} parent=1 // pred_check_branch
      %38 = sbr.rel (0) target = $region17
    $region16: #{tpu_custom_call.1} parent=1 // pred_region
      %39 = dma.done [#allocation3], 256
    $region17: #{tpu_custom_call.1} parent=1 // pred_fallthru
      _
    // Predicated region
    $region18: #{tpu_custom_call.1} parent=1 // pred_check
      _
    $region19: #{tpu_custom_call.1} parent=1 // pred_check_branch
      %41 = sbr.rel (0) target = $region21
    $region20: #{tpu_custom_call.1} parent=1 // pred_region
      %42 = dma.done [#allocation6], 512
    $region21: #{tpu_custom_call.1} parent=1 // pred_fallthru
      _
    %v43 = vld [vmem:[#allocation2] sm:$0xff]
    %v44 = vld [vmem:[#allocation2 + $0x8] sm:$0xff]
    %v45 = vld [vmem:[#allocation5] sm:$0xff]
    %v46 = vld [vmem:[#allocation5 + $0x8] sm:$0xff]
    %v47 = vld [vmem:[#allocation5 + $0x10] sm:$0xff]
    %v48 = vld [vmem:[#allocation5 + $0x18] sm:$0xff]
    %v49 = vld [vmem:[%s2] sm:$0x1]
    %v51 = vlaneseq
    %v52 = vshrl.u32 %v51, 7
    %v53 = vsub.s32 0, %v52
    %v54 = vrot.slane %v49, %v53
    %vm56 = vcmask 261120
    %v58 = vsel %vm56, %v43, 0
    %v61 = vsel %vm56, %v44, 0
    %v64 = vsel %vm56, %v45, 0
    %v67 = vsel %vm56, %v46, 0
    %v70 = vsel %vm56, %v47, 0
    %v73 = vsel %vm56, %v48, 0
    %75 = vmatprep.subr.mxu0 0.0
    %76 = vmatpush1.xpose.msra.mxu0 %v64
    %77 = vmatprep.subr.mxu0 0.0
    %78 = vmatpush1.xpose.msra.mxu0 %v67
    %79 = vmatprep.subr.mxu0 0.0
    %80 = vmatpush1.xpose.msra.mxu0 %v70
    %81 = vmatprep.subr.mxu0 0.0
    %82 = vmatpush1.xpose.msra.mxu0 %v73
    %83 = vmatprep.subr.mxu0 0.0
    %84 = vmatpush1.xpose.msra.mxu0 0.0
    %85 = vmatprep.subr.mxu0 0.0
    %86 = vmatpush1.xpose.msra.mxu0 0.0
    %87 = vmatprep.subr.mxu0 0.0
    %88 = vmatpush1.xpose.msra.mxu0 0.0
    %89 = vmatprep.subr.mxu0 0.0
    %90 = vmatpush1.xpose.msra.mxu0 0.0
    %91 = vmatprep.subr.mxu0 0.0
    %92 = vmatpush1.xpose.msra.mxu0 0.0
    %93 = vmatprep.subr.mxu0 0.0
    %94 = vmatpush1.xpose.msra.mxu0 0.0
    %95 = vmatprep.subr.mxu0 0.0
    %96 = vmatpush1.xpose.msra.mxu0 0.0
    %97 = vmatprep.subr.mxu0 0.0
    %98 = vmatpush1.xpose.msra.mxu0 0.0
    %99 = vmatprep.subr.mxu0 0.0
    %100 = vmatpush1.xpose.msra.mxu0 0.0
    %101 = vmatprep.subr.mxu0 0.0
    %102 = vmatpush1.xpose.msra.mxu0 0.0
    %103 = vmatprep.subr.mxu0 0.0
    %104 = vmatpush1.xpose.msra.mxu0 0.0
    %105 = vmatprep.subr.mxu0 0.0
    %106 = vmatpush1.xpose.msra.mxu0 0.0
    %107 = vmatprep.subr.mxu0 0.0
    %108 = vmatpush1.xpose.msra.mxu0 0.0
    %109 = vmatprep.subr.mxu0 0.0
    %110 = vmatpush1.xpose.msra.mxu0 0.0
    %111 = vmatprep.subr.mxu0 0.0
    %112 = vmatpush1.xpose.msra.mxu0 0.0
    %113 = vmatprep.subr.mxu0 0.0
    %114 = vmatpush1.xpose.msra.mxu0 0.0
    %115 = vmatprep.subr.mxu0 0.0
    %116 = vmatpush1.xpose.msra.mxu0 0.0
    %117 = vmatprep.subr.mxu0 0.0
    %118 = vmatpush1.xpose.msra.mxu0 0.0
    %119 = vmatprep.subr.mxu0 0.0
    %120 = vmatpush1.xpose.msra.mxu0 0.0
    %121 = vmatprep.subr.mxu0 0.0
    %122 = vmatpush1.xpose.msra.mxu0 0.0
    %123 = vmatprep.subr.mxu0 0.0
    %124 = vmatpush1.xpose.msra.mxu0 0.0
    %125 = vmatprep.subr.mxu0 0.0
    %126 = vmatpush1.xpose.msra.mxu0 0.0
    %127 = vmatprep.subr.mxu0 0.0
    %128 = vmatpush1.xpose.msra.mxu0 0.0
    %129 = vmatprep.subr.mxu0 0.0
    %130 = vmatpush1.xpose.msra.mxu0 0.0
    %131 = vmatprep.subr.mxu0 0.0
    %132 = vmatpush1.xpose.msra.mxu0 0.0
    %133 = vmatprep.subr.mxu0 0.0
    %134 = vmatpush1.xpose.msra.mxu0 0.0
    %135 = vmatprep.subr.mxu0 0.0
    %136 = vmatpush1.xpose.msra.mxu0 0.0
    %137 = vmatprep.subr.mxu0 0.0
    %138 = vmatpush1.xpose.msra.mxu0 0.0
    %139 = vmatprep.mubr.f32.mxu0 0.0
    %140 = vmatmul.mubr.f32.gmra.mrb[0].mxu0 %v58
    %v141 = vpop.f32.mrb[0].mxu0
    %v142 = vadd.f32 %v54, %v141
    %v143 = vpop.f32.mrb[0].mxu0
    %144 = vmatprep.mubr.f32.mxu0 0.0
    %145 = vmatmul.mubr.f32.gmra.mrb[0].mxu0 %v61
    %v146 = vpop.f32.mrb[0].mxu0
    %v147 = vadd.f32 %v54, %v146
    %v148 = vpop.f32.mrb[0].mxu0
    %149 = vdwg.mxu0
    %150 = vst.msk [vmem:[#allocation7] sm:$0xff] %vm56, %v142
    %151 = vst.msk [vmem:[#allocation7 + $0x8] sm:$0xff] %vm56, %v147
    // Predicated region
    $region22: #{tpu_custom_call.1} parent=1 // pred_check
      _
    $region23: #{tpu_custom_call.1} parent=1 // pred_check_branch
      %153 = sbr.rel (0) target = $region25
    $region24: #{tpu_custom_call.1} parent=1 // pred_region
      %s155 = ssub.s32 256, 256
      %156 = vsyncadd [#allocation4], %s155
      %s157 = sshll.u32 [#allocation7], 4
      %s158 = int_to_ptr.vmem [resolvable:$true] %s157
      %163 = dma.vmem_to_hbm [thread:$0]  %s158, 256, %s3, [#allocation4], 128, 128, 8
    $region25: #{tpu_custom_call.1} parent=1 // pred_fallthru
      _
    // Predicated region
    $region26: #{tpu_custom_call.1} parent=1 // pred_check
      _
    $region27: #{tpu_custom_call.1} parent=1 // pred_check_branch
      %165 = sbr.rel (0) target = $region29
    $region28: #{tpu_custom_call.1} parent=1 // pred_region
      %166 = dma.done [#allocation4], 256
    $region29: #{tpu_custom_call.1} parent=1 // pred_fallthru
      _
    %167 = vsyncpa [#allocation3], 1
    %168 = vsyncpa [#allocation6], 1
    %169 = vsyncpa [#allocation4], 1

</llo_original>
